<compile_context>
chip_gen: v7x
topology: tpu7x:2x2x1
jax: 0.10.0
libtpu: 0.0.40
codegen_flags: <defaults>
</compile_context>

<pallas_src>
import functools

import jax
import jax.numpy as jnp
from jax.experimental import pallas as pl
from jax.experimental.pallas import tpu as pltpu

HIDDEN = 64          # logical hidden size (matches nn.Linear(input, 64))
HIDDEN_PAD = 128     # lane-padded hidden size used inside the kernel
HEAD_PAD = 128       # lane-padded fused head width (actor + critic + zeros)


def _round_up(n, m):
    return (n + m - 1) // m * m


def actor_critic_kernel(x_ref, w1_ref, b1_ref, wh_ref, bh_ref, out_ref, *,
                        num_actions):
    x = x_ref[...]                                                    # (Bt, In)

    # fc1 + ReLU (MXU matmul, f32 accumulation). Padded hidden lanes are
    # exactly 0 after ReLU (zero weights + zero bias).
    h = jnp.dot(x, w1_ref[...], preferred_element_type=jnp.float32) + b1_ref[...]
    h = jnp.maximum(h, 0.0)                                           # (Bt, 128)

    # Fused heads: lanes [0, A) = actor logits, lane A = critic, rest = 0.
    z = jnp.dot(h, wh_ref[...], preferred_element_type=jnp.float32) + bh_ref[...]

    lane = jax.lax.broadcasted_iota(jnp.int32, z.shape, dimension=1)
    is_actor = lane < num_actions
    is_critic = lane == num_actions

    # Numerically-stable softmax over the actor lanes only.
    logits = jnp.where(is_actor, z, -jnp.inf)
    m = jnp.max(logits, axis=-1, keepdims=True)
    e = jnp.where(is_actor, jnp.exp(logits - m), 0.0)
    s = jnp.sum(e, axis=-1, keepdims=True)
    r = pl.reciprocal(s, approx=True)      # EUP vrcp
    r = r * (2.0 - s * r)                  # one Newton step -> ~f32 accurate
    probs = e * r                          # zero on non-actor lanes

    # Single lane-dense output slab: probs | critic value | zeros.
    out = jnp.where(is_critic, z, probs)
    out_ref[...] = out.astype(out_ref.dtype)                          # (Bt, 128)


def actor_critic_forward(x, packed_params, num_actions):
    """x: (batch, in_features) f32; packed_params from pack_params()."""
    w1p, b1p, whp, bhp = packed_params
    batch, in_features = x.shape

    # Batch tiling: full batch for small inputs, 512-row tiles for big ones.
    tile_b = min(512, _round_up(batch, 8))
    b_pad = _round_up(batch, tile_b)
    if b_pad != batch:
        x = jnp.pad(x, ((0, b_pad - batch), (0, 0)))

    grid = (b_pad // tile_b,)
    kernel = functools.partial(actor_critic_kernel, num_actions=num_actions)

    out = pl.pallas_call(
        kernel,
        out_shape=jax.ShapeDtypeStruct((b_pad, HEAD_PAD), jnp.float32),
        grid_spec=pltpu.PrefetchScalarGridSpec(
            num_scalar_prefetch=0,
            grid=grid,
            in_specs=[
                pl.BlockSpec((tile_b, in_features), lambda i: (i, 0)),   # x
                pl.BlockSpec((in_features, HIDDEN_PAD), lambda i: (0, 0)),  # w1
                pl.BlockSpec((1, HIDDEN_PAD), lambda i: (0, 0)),         # b1
                pl.BlockSpec((HIDDEN_PAD, HEAD_PAD), lambda i: (0, 0)),  # heads W
                pl.BlockSpec((1, HEAD_PAD), lambda i: (0, 0)),           # heads b
            ],
            out_specs=pl.BlockSpec((tile_b, HEAD_PAD), lambda i: (i, 0)),
        ),
        compiler_params=pltpu.CompilerParams(
            dimension_semantics=("parallel",)),
    )(x, w1p, b1p, whp, bhp)

    actor = out[:batch, :num_actions]
    critic = out[:batch, num_actions:num_actions + 1]
    return actor, critic


def init_params(key, input_size, output_size):
    """PyTorch-nn.Linear-style init (uniform +-1/sqrt(fan_in)), unpadded."""
    k1, k2, k3, k4, k5, k6 = jax.random.split(key, 6)

    def lin(kw, kb, fan_in, fan_out):
        bound = 1.0 / jnp.sqrt(jnp.float32(fan_in))
        w = jax.random.uniform(kw, (fan_in, fan_out), jnp.float32, -bound, bound)
        b = jax.random.uniform(kb, (fan_out,), jnp.float32, -bound, bound)
        return w, b

    w1, b1 = lin(k1, k2, input_size, HIDDEN)
    wa, ba = lin(k3, k4, HIDDEN, output_size)
    wc, bc = lin(k5, k6, HIDDEN, 1)
    return (w1, b1, wa, ba, wc, bc)


def pack_params(params, output_size):
    """One-time layout transform: pad HIDDEN->128, fuse actor+critic heads."""
    w1, b1, wa, ba, wc, bc = params
    in_features = w1.shape[0]
    assert output_size + 1 <= HEAD_PAD, "fused head must fit in 128 lanes"

    w1p = jnp.zeros((in_features, HIDDEN_PAD), jnp.float32).at[:, :HIDDEN].set(w1)
    b1p = jnp.zeros((1, HIDDEN_PAD), jnp.float32).at[0, :HIDDEN].set(b1)

    whp = jnp.zeros((HIDDEN_PAD, HEAD_PAD), jnp.float32)
    whp = whp.at[:HIDDEN, :output_size].set(wa)
    whp = whp.at[:HIDDEN, output_size:output_size + 1].set(wc)

    bhp = jnp.zeros((1, HEAD_PAD), jnp.float32)
    bhp = bhp.at[0, :output_size].set(ba)
    bhp = bhp.at[0, output_size].set(bc[0])

    return (w1p, b1p, whp, bhp)


def reference_forward(x, params):
    w1, b1, wa, ba, wc, bc = params
    h = jnp.maximum(x @ w1 + b1, 0.0)
    actor = jax.nn.softmax(h @ wa + ba, axis=-1)
    critic = h @ wc + bc
    return actor, critic


if __name__ == "__main__":
    batch, input_size, output_size = 8, 32, 8

    key = jax.random.PRNGKey(0)
    kx, kp = jax.random.split(key)
    x = jax.random.normal(kx, (batch, input_size), jnp.float32)

    params = init_params(kp, input_size, output_size)
    packed = pack_params(params, output_size)

    fwd = jax.jit(lambda xx, pp: actor_critic_forward(xx, pp, output_size))
    actor, critic = fwd(x, packed)
    jax.block_until_ready((actor, critic))

    ref_actor, ref_critic = reference_forward(x, params)
    assert actor.shape == (batch, output_size)
    assert critic.shape == (batch, 1)
    assert jnp.allclose(actor, ref_actor, atol=1e-5, rtol=1e-5)
    assert jnp.allclose(critic, ref_critic, atol=1e-5, rtol=1e-5)
    assert jnp.allclose(jnp.sum(actor, axis=-1), 1.0, atol=1e-5)

    print("KERNEL_OK")
</pallas_src>

<mosaic_0001>
module attributes {stable_mosaic.version = 11 : i64} {
  func.func @actor_critic_kernel(%arg0: i32, %arg1: memref<8x32xf32, #tpu.memory_space<vmem>>, %arg2: memref<32x128xf32, #tpu.memory_space<vmem>>, %arg3: memref<1x128xf32, #tpu.memory_space<vmem>>, %arg4: memref<128x128xf32, #tpu.memory_space<vmem>>, %arg5: memref<1x128xf32, #tpu.memory_space<vmem>>, %arg6: memref<8x128xf32, #tpu.memory_space<vmem>>) attributes {dimension_semantics = [#tpu.dimension_semantics<parallel>], iteration_bounds = array<i64: 1>, scalar_prefetch = 0 : i64, scratch_operands = 0 : i64, tpu.core_type = #tpu.core_type<tc>, window_params = [{transform_indices = @transform_0, window_bounds = array<i64: 8, 32>}, {pipeline_mode = #tpu.pipeline_mode<synchronous>, transform_indices = @transform_1, window_bounds = array<i64: 32, 128>}, {pipeline_mode = #tpu.pipeline_mode<synchronous>, transform_indices = @transform_2, window_bounds = array<i64: 1, 128>}, {pipeline_mode = #tpu.pipeline_mode<synchronous>, transform_indices = @transform_3, window_bounds = array<i64: 128, 128>}, {pipeline_mode = #tpu.pipeline_mode<synchronous>, transform_indices = @transform_4, window_bounds = array<i64: 1, 128>}, {transform_indices = @transform_5, window_bounds = array<i64: 8, 128>}]} {
    %c0 = arith.constant 0 : index
    %c0_0 = arith.constant 0 : index
    %0 = vector.load %arg1[%c0, %c0_0] : memref<8x32xf32, #tpu.memory_space<vmem>>, vector<8x32xf32>
    %c0_1 = arith.constant 0 : index
    %c0_2 = arith.constant 0 : index
    %1 = vector.load %arg2[%c0_1, %c0_2] : memref<32x128xf32, #tpu.memory_space<vmem>>, vector<32x128xf32>
    %cst = arith.constant dense<0.000000e+00> : vector<8x128xf32>
    %2 = tpu.matmul %0, %1, %cst {dimension_numbers = #tpu.dot_dimension_numbers<[1], [0], [0], [1], [0, 0, 1, 1], [], []>} : vector<8x32xf32>, vector<32x128xf32>, vector<8x128xf32> -> vector<8x128xf32>
    %c0_3 = arith.constant 0 : index
    %c0_4 = arith.constant 0 : index
    %3 = vector.load %arg3[%c0_3, %c0_4] : memref<1x128xf32, #tpu.memory_space<vmem>>, vector<1x128xf32>
    %4 = vector.broadcast %3 : vector<1x128xf32> to vector<8x128xf32>
    %5 = arith.addf %2, %4 : vector<8x128xf32>
    %cst_5 = arith.constant 0.000000e+00 : f32
    %6 = vector.broadcast %cst_5 : f32 to vector<8x128xf32>
    %7 = arith.maximumf %5, %6 : vector<8x128xf32>
    %c0_6 = arith.constant 0 : index
    %c0_7 = arith.constant 0 : index
    %8 = vector.load %arg4[%c0_6, %c0_7] : memref<128x128xf32, #tpu.memory_space<vmem>>, vector<128x128xf32>
    %cst_8 = arith.constant dense<0.000000e+00> : vector<8x128xf32>
    %9 = tpu.matmul %7, %8, %cst_8 {dimension_numbers = #tpu.dot_dimension_numbers<[1], [0], [0], [1], [0, 0, 1, 1], [], []>} : vector<8x128xf32>, vector<128x128xf32>, vector<8x128xf32> -> vector<8x128xf32>
    %c0_9 = arith.constant 0 : index
    %c0_10 = arith.constant 0 : index
    %10 = vector.load %arg5[%c0_9, %c0_10] : memref<1x128xf32, #tpu.memory_space<vmem>>, vector<1x128xf32>
    %11 = vector.broadcast %10 : vector<1x128xf32> to vector<8x128xf32>
    %12 = arith.addf %9, %11 : vector<8x128xf32>
    %13 = tpu.iota {dimensions = array<i32: 1>} : vector<8x128xi32>
    %c8_i32 = arith.constant 8 : i32
    %14 = vector.broadcast %c8_i32 : i32 to vector<8x128xi32>
    %15 = arith.cmpi slt, %13, %14 : vector<8x128xi32>
    %c8_i32_11 = arith.constant 8 : i32
    %16 = vector.broadcast %c8_i32_11 : i32 to vector<8x128xi32>
    %17 = arith.cmpi eq, %13, %16 : vector<8x128xi32>
    %cst_12 = arith.constant 0xFF800000 : f32
    %18 = vector.broadcast %cst_12 : f32 to vector<8x128xf32>
    %19 = arith.select %15, %12, %18 : vector<8x128xi1>, vector<8x128xf32>
    %cst_13 = arith.constant dense<0xFF800000> : vector<8xf32>
    %20 = vector.multi_reduction <maximumf>, %19, %cst_13 [1] : vector<8x128xf32> to vector<8xf32>
    %21 = vector.shape_cast %20 : vector<8xf32> to vector<8x1xf32>
    %22 = vector.broadcast %21 : vector<8x1xf32> to vector<8x128xf32>
    %23 = arith.subf %19, %22 : vector<8x128xf32>
    %24 = math.exp %23 : vector<8x128xf32>
    %cst_14 = arith.constant 0.000000e+00 : f32
    %25 = vector.broadcast %cst_14 : f32 to vector<8x128xf32>
    %26 = arith.select %15, %24, %25 : vector<8x128xi1>, vector<8x128xf32>
    %cst_15 = arith.constant dense<0.000000e+00> : vector<8xf32>
    %27 = vector.multi_reduction <add>, %26, %cst_15 [1] : vector<8x128xf32> to vector<8xf32>
    %28 = vector.shape_cast %27 : vector<8xf32> to vector<8x1xf32>
    %29 = tpu.reciprocal %28 {approx = true} : vector<8x1xf32> -> vector<8x1xf32>
    %30 = arith.mulf %28, %29 : vector<8x1xf32>
    %cst_16 = arith.constant 2.000000e+00 : f32
    %31 = vector.broadcast %cst_16 : f32 to vector<8x1xf32>
    %32 = arith.subf %31, %30 : vector<8x1xf32>
    %33 = arith.mulf %29, %32 : vector<8x1xf32>
    %34 = vector.broadcast %33 : vector<8x1xf32> to vector<8x128xf32>
    %35 = arith.mulf %26, %34 : vector<8x128xf32>
    %36 = arith.select %17, %12, %35 : vector<8x128xi1>, vector<8x128xf32>
    %c0_17 = arith.constant 0 : index
    %c0_18 = arith.constant 0 : index
    %37 = vector.load %arg6[%c0_17, %c0_18] : memref<8x128xf32, #tpu.memory_space<vmem>>, vector<8x128xf32>
    tpu.vector_store %arg6[%c0_17, %c0_18], %36 {strides = array<i32>} : memref<8x128xf32, #tpu.memory_space<vmem>>, vector<8x128xf32>,
    return
  }
  func.func @transform_0(%arg0: i32) -> (i32, i32) {
    %c0_i32 = arith.constant 0 : i32
    %c0_i32_0 = arith.constant 0 : i32
    return %arg0, %c0_i32 : i32, i32
  }
  func.func @transform_1(%arg0: i32) -> (i32, i32) {
    %c0_i32 = arith.constant 0 : i32
    %c0_i32_0 = arith.constant 0 : i32
    %c0_i32_1 = arith.constant 0 : i32
    return %c0_i32, %c0_i32_0 : i32, i32
  }
  func.func @transform_2(%arg0: i32) -> (i32, i32) {
    %c0_i32 = arith.constant 0 : i32
    %c0_i32_0 = arith.constant 0 : i32
    %c0_i32_1 = arith.constant 0 : i32
    return %c0_i32, %c0_i32_0 : i32, i32
  }
  func.func @transform_3(%arg0: i32) -> (i32, i32) {
    %c0_i32 = arith.constant 0 : i32
    %c0_i32_0 = arith.constant 0 : i32
    %c0_i32_1 = arith.constant 0 : i32
    return %c0_i32, %c0_i32_0 : i32, i32
  }
  func.func @transform_4(%arg0: i32) -> (i32, i32) {
    %c0_i32 = arith.constant 0 : i32
    %c0_i32_0 = arith.constant 0 : i32
    %c0_i32_1 = arith.constant 0 : i32
    return %c0_i32, %c0_i32_0 : i32, i32
  }
  func.func @transform_5(%arg0: i32) -> (i32, i32) {
    %c0_i32 = arith.constant 0 : i32
    %c0_i32_0 = arith.constant 0 : i32
    return %arg0, %c0_i32 : i32, i32
  }
}

</mosaic_0001>

<llo_original>
// kernel: _lambda_.1
$region0: #{_lambda_.1}
  #allocation0 [shape = 'u32[]', space=smem, size = 0x4, offset = 0x4, fixed_abs, tag = 'smem constant byte address 0x4 - core index']
  #allocation1 [shape = 'u32[144,128]{1,0:T(1,128)}', space=vmem, size = 0x12000, scoped, tag = 'internal scratch']
  %s0 = inlined_call_operand.hbm [shape: f32[8,32], index: 0, kind: input, shape index: {}]
  %s1 = inlined_call_operand.hbm [shape: f32[32,128], index: 1, kind: input, shape index: {}]
  %s2 = inlined_call_operand.vmem [shape: f32[1,128], index: 2, kind: input, shape index: {}]
  %s3 = inlined_call_operand.hbm [shape: f32[128,128], index: 3, kind: input, shape index: {}]
  %s4 = inlined_call_operand.vmem [shape: f32[1,128], index: 4, kind: input, shape index: {}]
  %s5 = inlined_call_operand.vmem [shape: f32[8,128], index: 5, kind: output, shape index: {}]
  %s6 = sld [smem:[#allocation0]]
  $region42: #{_lambda_.1} parent=0
    _
  %s8 = ssub.s32 1, %s6
  %s9 = scalar_select 0, %s8, %s6
  $region1: #{_lambda_.1} parent=0
    #allocation2 [shape = 'u8[4096]{0}', space=vmem, size = 0x1000, scoped, tag = 'input window, operand 0, single buffered']
    #allocation3 [shape = 's32[1]{0}', space=sflag, size = 0x4, scoped, tag = 'scoped memory for _lambda_.1']
    #allocation4 [shape = 'u8[16384]{0}', space=vmem, size = 0x4000, scoped, tag = 'input window, operand 1, single buffered']
    #allocation5 [shape = 's32[1]{0}', space=sflag, size = 0x4, scoped, tag = 'scoped memory for _lambda_.1']
    #allocation6 [shape = 'u8[65536]{0}', space=vmem, size = 0x10000, scoped, tag = 'input window, operand 3, single buffered']
    %10 = vsyncpa [#allocation3], 0
    %11 = vsyncpa [#allocation5], 0
    // Predicated region
    $region2: #{_lambda_.1} parent=1 // pred_check
      _
    $region3: #{_lambda_.1} parent=1 // pred_check_branch
      %13 = sbr.rel (0) target = $region5
    $region4: #{_lambda_.1} parent=1 // pred_region
      %s15 = ssub.s32 128, 128
      %16 = vsyncadd [#allocation3], %s15
      %s18 = sshll.u32 [#allocation2], 4
      %s19 = int_to_ptr.vmem [resolvable:$true] %s18
      %21 = dma.hbm_to_vmem [thread:$0]  %s0, 128, %s19, [#allocation3]
    $region5: #{_lambda_.1} parent=1 // pred_fallthru
      _
    // Predicated region
    $region6: #{_lambda_.1} parent=1 // pred_check
      _
    $region7: #{_lambda_.1} parent=1 // pred_check_branch
      %23 = sbr.rel (0) target = $region9
    $region8: #{_lambda_.1} parent=1 // pred_region
      %s25 = ssub.s32 512, 512
      %26 = vsyncadd [#allocation5], %s25
      %s27 = sshll.u32 [#allocation4], 4
      %s28 = int_to_ptr.vmem [resolvable:$true] %s27
      %33 = dma.hbm_to_vmem [thread:$0]  %s1, 512, %s28, [#allocation5], 128, 128, 8
    $region9: #{_lambda_.1} parent=1 // pred_fallthru
      _
    // Predicated region
    $region10: #{_lambda_.1} parent=1 // pred_check
      _
    $region11: #{_lambda_.1} parent=1 // pred_check_branch
      %35 = sbr.rel (0) target = $region13
    $region12: #{_lambda_.1} parent=1 // pred_region
      _
    $region13: #{_lambda_.1} parent=1 // pred_fallthru
      _
    // Predicated region
    $region14: #{_lambda_.1} parent=1 // pred_check
      _
    $region15: #{_lambda_.1} parent=1 // pred_check_branch
      %37 = sbr.rel (0) target = $region17
    $region16: #{_lambda_.1} parent=1 // pred_region
      %s39 = ssub.s32 2048, 2048
      %40 = vsyncadd [#allocation5], %s39
      %s41 = sshll.u32 [#allocation6], 4
      %s42 = int_to_ptr.vmem [resolvable:$true] %s41
      %47 = dma.hbm_to_vmem [thread:$0]  %s3, 2048, %s42, [#allocation5], 128, 128, 8
    $region17: #{_lambda_.1} parent=1 // pred_fallthru
      _
    // Predicated region
    $region18: #{_lambda_.1} parent=1 // pred_check
      _
    $region19: #{_lambda_.1} parent=1 // pred_check_branch
      %49 = sbr.rel (0) target = $region21
    $region20: #{_lambda_.1} parent=1 // pred_region
      _
    $region21: #{_lambda_.1} parent=1 // pred_fallthru
      _
    // Predicated region
    $region22: #{_lambda_.1} parent=1 // pred_check
      _
    $region23: #{_lambda_.1} parent=1 // pred_check_branch
      %51 = sbr.rel (0) target = $region25
    $region24: #{_lambda_.1} parent=1 // pred_region
      %52 = dma.done [#allocation3], 128
    $region25: #{_lambda_.1} parent=1 // pred_fallthru
      _
    // Predicated region
    $region26: #{_lambda_.1} parent=1 // pred_check
      _
    $region27: #{_lambda_.1} parent=1 // pred_check_branch
      %54 = sbr.rel (0) target = $region29
    $region28: #{_lambda_.1} parent=1 // pred_region
      %55 = dma.done [#allocation5], 512
    $region29: #{_lambda_.1} parent=1 // pred_fallthru
      _
    // Predicated region
    $region30: #{_lambda_.1} parent=1 // pred_check
      _
    $region31: #{_lambda_.1} parent=1 // pred_check_branch
      %57 = sbr.rel (0) target = $region33
    $region32: #{_lambda_.1} parent=1 // pred_region
      %58 = dma.done [#allocation5], 2048
    $region33: #{_lambda_.1} parent=1 // pred_fallthru
      _
    %v59 = vld [vmem:[#allocation2] sm:$0xff]
    %v60 = vld [vmem:[#allocation4] sm:$0xff]
    %v61 = vld [vmem:[#allocation4 + $0x8] sm:$0xff]
    %v62 = vld [vmem:[#allocation4 + $0x10] sm:$0xff]
    %v63 = vld [vmem:[#allocation4 + $0x18] sm:$0xff]
    %v64 = vld [vmem:[%s2] sm:$0x1]
    %v66 = vlaneseq
    %v67 = vshrl.u32 %v66, 7
    %v68 = vsub.s32 0, %v67
    %v69 = vrot.slane %v64, %v68
    %vm71 = vcmask 261120
    %v73 = vsel %vm71, %v59, 0
    %75 = vmatprep.subr.mxu0 0.0
    %76 = vmatpush1.msra.mxu0 %v60
    %77 = vmatprep.subr.mxu0 0.0
    %78 = vmatpush1.msra.mxu0 %v61
    %79 = vmatprep.subr.mxu0 0.0
    %80 = vmatpush1.msra.mxu0 %v62
    %81 = vmatprep.subr.mxu0 0.0
    %82 = vmatpush1.msra.mxu0 %v63
    %83 = vmatprep.subr.mxu0 0.0
    %84 = vmatpush1.msra.mxu0 0.0
    %85 = vmatprep.subr.mxu0 0.0
    %86 = vmatpush1.msra.mxu0 0.0
    %87 = vmatprep.subr.mxu0 0.0
    %88 = vmatpush1.msra.mxu0 0.0
    %89 = vmatprep.subr.mxu0 0.0
    %90 = vmatpush1.msra.mxu0 0.0
    %91 = vmatprep.subr.mxu0 0.0
    %92 = vmatpush1.msra.mxu0 0.0
    %93 = vmatprep.subr.mxu0 0.0
    %94 = vmatpush1.msra.mxu0 0.0
    %95 = vmatprep.subr.mxu0 0.0
    %96 = vmatpush1.msra.mxu0 0.0
    %97 = vmatprep.subr.mxu0 0.0
    %98 = vmatpush1.msra.mxu0 0.0
    %99 = vmatprep.subr.mxu0 0.0
    %100 = vmatpush1.msra.mxu0 0.0
    %101 = vmatprep.subr.mxu0 0.0
    %102 = vmatpush1.msra.mxu0 0.0
    %103 = vmatprep.subr.mxu0 0.0
    %104 = vmatpush1.msra.mxu0 0.0
    %105 = vmatprep.subr.mxu0 0.0
    %106 = vmatpush1.msra.mxu0 0.0
    %107 = vmatprep.subr.mxu0 0.0
    %108 = vmatpush1.msra.mxu0 0.0
    %109 = vmatprep.subr.mxu0 0.0
    %110 = vmatpush1.msra.mxu0 0.0
    %111 = vmatprep.subr.mxu0 0.0
    %112 = vmatpush1.msra.mxu0 0.0
    %113 = vmatprep.subr.mxu0 0.0
    %114 = vmatpush1.msra.mxu0 0.0
    %115 = vmatprep.subr.mxu0 0.0
    %116 = vmatpush1.msra.mxu0 0.0
    %117 = vmatprep.subr.mxu0 0.0
    %118 = vmatpush1.msra.mxu0 0.0
    %119 = vmatprep.subr.mxu0 0.0
    %120 = vmatpush1.msra.mxu0 0.0
    %121 = vmatprep.subr.mxu0 0.0
    %122 = vmatpush1.msra.mxu0 0.0
    %123 = vmatprep.subr.mxu0 0.0
    %124 = vmatpush1.msra.mxu0 0.0
    %125 = vmatprep.subr.mxu0 0.0
    %126 = vmatpush1.msra.mxu0 0.0
    %127 = vmatprep.subr.mxu0 0.0
    %128 = vmatpush1.msra.mxu0 0.0
    %129 = vmatprep.subr.mxu0 0.0
    %130 = vmatpush1.msra.mxu0 0.0
    %131 = vmatprep.subr.mxu0 0.0
    %132 = vmatpush1.msra.mxu0 0.0
    %133 = vmatprep.subr.mxu0 0.0
    %134 = vmatpush1.msra.mxu0 0.0
    %135 = vmatprep.subr.mxu0 0.0
    %136 = vmatpush1.msra.mxu0 0.0
    %137 = vmatprep.subr.mxu0 0.0
    %138 = vmatpush1.msra.mxu0 0.0
    %139 = vmatprep.mubr.f32.mxu0 0.0
    %140 = vmatmul.mubr.f32.gmra.mrb[0].mxu0 %v73
    %v141 = vpop.f32.mrb[0].mxu0
    %v142 = vadd.f32 %v69, %v141
    %v143 = vpop.f32.mrb[0].mxu0
    %144 = vdwg.mxu0
    %v145 = vmax.f32 %v142, 0.0
    %v146 = vld [vmem:[#allocation6] sm:$0xff]
    %v147 = vld [vmem:[#allocation6 + $0x8] sm:$0xff]
    %v148 = vld [vmem:[#allocation6 + $0x10] sm:$0xff]
    %v149 = vld [vmem:[#allocation6 + $0x18] sm:$0xff]
    %v150 = vld [vmem:[#allocation6 + $0x20] sm:$0xff]
    %v151 = vld [vmem:[#allocation6 + $0x28] sm:$0xff]
    %v152 = vld [vmem:[#allocation6 + $0x30] sm:$0xff]
    %v153 = vld [vmem:[#allocation6 + $0x38] sm:$0xff]
    %v154 = vld [vmem:[#allocation6 + $0x40] sm:$0xff]
    %v155 = vld [vmem:[#allocation6 + $0x48] sm:$0xff]
    %v156 = vld [vmem:[#allocation6 + $0x50] sm:$0xff]
    %v157 = vld [vmem:[#allocation6 + $0x58] sm:$0xff]
    %v158 = vld [vmem:[#allocation6 + $0x60] sm:$0xff]
    %v159 = vld [vmem:[#allocation6 + $0x68] sm:$0xff]
    %v160 = vld [vmem:[#allocation6 + $0x70] sm:$0xff]
    %v161 = vld [vmem:[#allocation6 + $0x78] sm:$0xff]
    %v162 = vld [vmem:[%s4] sm:$0x1]
    %v164 = vlaneseq
    %v165 = vshrl.u32 %v164, 7
    %v166 = vsub.s32 0, %v165
    %v167 = vrot.slane %v162, %v166
    %169 = vmatprep.subr.mxu0 0.0
    %170 = vmatpush1.msra.mxu0 %v146
    %171 = vmatprep.subr.mxu0 0.0
    %172 = vmatpush1.msra.mxu0 %v147
    %173 = vmatprep.subr.mxu0 0.0
    %174 = vmatpush1.msra.mxu0 %v148
    %175 = vmatprep.subr.mxu0 0.0
    %176 = vmatpush1.msra.mxu0 %v149
    %177 = vmatprep.subr.mxu0 0.0
    %178 = vmatpush1.msra.mxu0 %v150
    %179 = vmatprep.subr.mxu0 0.0
    %180 = vmatpush1.msra.mxu0 %v151
    %181 = vmatprep.subr.mxu0 0.0
    %182 = vmatpush1.msra.mxu0 %v152
    %183 = vmatprep.subr.mxu0 0.0
    %184 = vmatpush1.msra.mxu0 %v153
    %185 = vmatprep.subr.mxu0 0.0
    %186 = vmatpush1.msra.mxu0 %v154
    %187 = vmatprep.subr.mxu0 0.0
    %188 = vmatpush1.msra.mxu0 %v155
    %189 = vmatprep.subr.mxu0 0.0
    %190 = vmatpush1.msra.mxu0 %v156
    %191 = vmatprep.subr.mxu0 0.0
    %192 = vmatpush1.msra.mxu0 %v157
    %193 = vmatprep.subr.mxu0 0.0
    %194 = vmatpush1.msra.mxu0 %v158
    %195 = vmatprep.subr.mxu0 0.0
    %196 = vmatpush1.msra.mxu0 %v159
    %197 = vmatprep.subr.mxu0 0.0
    %198 = vmatpush1.msra.mxu0 %v160
    %199 = vmatprep.subr.mxu0 0.0
    %200 = vmatpush1.msra.mxu0 %v161
    %201 = vmatprep.subr.mxu0 0.0
    %202 = vmatpush1.msra.mxu0 0.0
    %203 = vmatprep.subr.mxu0 0.0
    %204 = vmatpush1.msra.mxu0 0.0
    %205 = vmatprep.subr.mxu0 0.0
    %206 = vmatpush1.msra.mxu0 0.0
    %207 = vmatprep.subr.mxu0 0.0
    %208 = vmatpush1.msra.mxu0 0.0
    %209 = vmatprep.subr.mxu0 0.0
    %210 = vmatpush1.msra.mxu0 0.0
    %211 = vmatprep.subr.mxu0 0.0
    %212 = vmatpush1.msra.mxu0 0.0
    %213 = vmatprep.subr.mxu0 0.0
    %214 = vmatpush1.msra.mxu0 0.0
    %215 = vmatprep.subr.mxu0 0.0
    %216 = vmatpush1.msra.mxu0 0.0
    %217 = vmatprep.subr.mxu0 0.0
    %218 = vmatpush1.msra.mxu0 0.0
    %219 = vmatprep.subr.mxu0 0.0
    %220 = vmatpush1.msra.mxu0 0.0
    %221 = vmatprep.subr.mxu0 0.0
    %222 = vmatpush1.msra.mxu0 0.0
    %223 = vmatprep.subr.mxu0 0.0
    %224 = vmatpush1.msra.mxu0 0.0
    %225 = vmatprep.subr.mxu0 0.0
    %226 = vmatpush1.msra.mxu0 0.0
    %227 = vmatprep.subr.mxu0 0.0
    %228 = vmatpush1.msra.mxu0 0.0
    %229 = vmatprep.subr.mxu0 0.0
    %230 = vmatpush1.msra.mxu0 0.0
    %231 = vmatprep.subr.mxu0 0.0
    %232 = vmatpush1.msra.mxu0 0.0
    %233 = vmatprep.mubr.f32.mxu0 0.0
    %234 = vmatmul.mubr.f32.gmra.mrb[0].mxu0 %v145
    %v235 = vpop.f32.mrb[0].mxu0
    %v236 = vadd.f32 %v167, %v235
    %v237 = vpop.f32.mrb[0].mxu0
    %238 = vdwg.mxu0
    %v239 = vlaneseq
    %v240 = vand.u32 %v239, 127
    %vm241 = vcmp.lt.s32.totalorder %v240, 8
    %vm242 = vcmp.eq.s32.totalorder %v240, 8
    %v243 = vsel %vm241, %v236, -inf
    %244 = vmax.xlane.f32.xlu0 %v243
    %v245 = vpop.xlane.xlu0 %244
    %v246 = vsub.f32 %v243, %v245
    %v247 = vmul.f32 %v246, 1.442695
    %v248 = vpow.pop %v247
    %v249 = vsel %vm241, %v248, 0.0
    %250 = vadd.xlane.f32.xlu0 %v249
    %v251 = vpop.xlane.xlu0 %250
    %v252 = vrcp.pop %v251
    %v253 = vmul.f32 %v251, %v252
    %v254 = vsub.f32 2.0, %v253
    %v255 = vmul.f32 %v252, %v254
    %v256 = vmul.f32 %v249, %v255
    %v257 = vsel %vm242, %v236, %v256
    %258 = vst [vmem:[%s5] sm:$0xff] %v257
    // Predicated region
    $region34: #{_lambda_.1} parent=1 // pred_check
      _
    $region35: #{_lambda_.1} parent=1 // pred_check_branch
      %260 = sbr.rel (0) target = $region37
    $region36: #{_lambda_.1} parent=1 // pred_region
      _
    $region37: #{_lambda_.1} parent=1 // pred_fallthru
      _
    // Predicated region
    $region38: #{_lambda_.1} parent=1 // pred_check
      _
    $region39: #{_lambda_.1} parent=1 // pred_check_branch
      %262 = sbr.rel (0) target = $region41
    $region40: #{_lambda_.1} parent=1 // pred_region
      _
    $region41: #{_lambda_.1} parent=1 // pred_fallthru
      _
    %263 = vsyncpa [#allocation3], 1
    %264 = vsyncpa [#allocation5], 1

</llo_original>
